<compile_context>
chip_gen: v5e
topology: v5e:2x2
jax: 0.10.0
libtpu: 0.0.40
codegen_flags: <defaults>
</compile_context>

<pallas_src>
import jax
import jax.numpy as jnp
from jax.experimental import pallas as pl
from jax.experimental.pallas import tpu as pltpu

HID = 128              # per-head hidden width (fixed by the PyTorch module)
FUSED_HID = 2 * HID    # 256: policy hidden || value hidden
_LANE = 128
_SUBLANE = 8
_MAX_BLOCK_B = 2048    # ~1.3 MB/step at H_pad=128 bf16: amortizes ~0.35us/step


def _round_up(x, m):
    return ((x + m - 1) // m) * m


def _pred_kernel(x_ref, w1_ref, b1_ref, w2_ref, b2_ref, out_ref):
    """Fused two-head MLP: (H,256) matmul + bias + ReLU + (256,128) matmul."""
    h = jnp.dot(x_ref[...], w1_ref[...], preferred_element_type=jnp.float32)
    h = jnp.maximum(h + b1_ref[...], 0.0)
    # Feed the second MXU pass in the compute dtype (bf16 in the default
    # config); accumulate in f32, add f32 bias, cast once on store.
    out = jnp.dot(h.astype(w2_ref.dtype), w2_ref[...],
                  preferred_element_type=jnp.float32) + b2_ref[...]
    out_ref[...] = out.astype(out_ref.dtype)


def pack_params(p, actions, *, compute_dtype=jnp.bfloat16):
    """Pack PyTorch-layout params into the fused kernel layout (done once).

    compute_dtype: dtype of x/W1/W2 on the MXU (bf16 by default — native on
    v5e/v6e/v7x and halves weight/activation DMA bytes). Biases stay f32 and
    accumulation is always f32.
    """
    A = actions
    H = p["w1p"].shape[0]
    H_pad = _round_up(max(H, _LANE), _LANE)        # dense lanes / aligned K
    out_dim = _round_up(A + 1, _LANE)              # lane-dense output slab

    w1 = jnp.concatenate([p["w1p"], p["w1v"]], axis=1)          # (H, 256)
    if H_pad != H:
        w1 = jnp.pad(w1, ((0, H_pad - H), (0, 0)))              # zero rows
    b1 = jnp.concatenate([p["b1p"], p["b1v"]], axis=1)          # (1, 256)

    w2 = jnp.zeros((FUSED_HID, out_dim), jnp.float32)           # (256, 128)
    w2 = w2.at[:HID, :A].set(p["w2p"])                          # policy block
    w2 = w2.at[HID:, A].set(p["w2v"][:, 0])                     # value column

    b2 = jnp.zeros((1, out_dim), jnp.float32)
    b2 = b2.at[0, :A].set(p["b2p"][0])
    b2 = b2.at[0, A].set(p["b2v"][0, 0])

    return dict(
        w1=w1.astype(compute_dtype),
        b1=b1.astype(jnp.float32),
        w2=w2.astype(compute_dtype),
        b2=b2.astype(jnp.float32),
        actions=A,
        hidden=H,
    )


def _choose_block_b(B):
    """Batch tile: small batches run in one step; B>=512 gets >=2 grid steps
    (v7x megacore) and is capped at _MAX_BLOCK_B so huge/ragged batches never
    blow scoped/physical VMEM and always pipeline HBM<->VMEM."""
    Bp = _round_up(B, _SUBLANE)
    if Bp < 512:
        return Bp
    half = _round_up(pl.cdiv(Bp, 2), _SUBLANE)
    return min(_MAX_BLOCK_B, half)


def pred_model_forward(x, packed, *, block_b=None, out_dtype=None):
    """Fused prediction-head forward.

    x: (B, H) float32 (or any float dtype)
    packed: output of pack_params
    Returns: (policy (B, A), value (B,)) in out_dtype (defaults to the packed
    compute dtype).
    """
    B, H = x.shape
    assert H == packed["hidden"], "x feature dim does not match packed params"
    A = packed["actions"]
    w1, b1, w2, b2 = packed["w1"], packed["b1"], packed["w2"], packed["b2"]
    H_pad = w1.shape[0]
    out_dim = w2.shape[1]
    compute_dtype = w1.dtype
    if out_dtype is None:
        out_dtype = compute_dtype

    if block_b is None:
        block_b = _choose_block_b(B)
    assert block_b % _SUBLANE == 0, "block_b must be a multiple of 8"
    B_pad = _round_up(B, block_b)
    grid = (B_pad // block_b,)

    # One-time layout plumbing outside the hot loop: cast to the MXU compute
    # dtype, zero-pad features to a lane multiple and batch to the tile size.
    xp = x.astype(compute_dtype)
    if H_pad != H or B_pad != B:
        xp = jnp.pad(xp, ((0, B_pad - B), (0, H_pad - H)))

    def full2d(shape):
        # Grid-invariant block (index_map constant) -> Mosaic skips re-fetch.
        return pl.BlockSpec(shape, lambda i: (0, 0))

    in_specs = [
        pl.BlockSpec((block_b, H_pad), lambda i: (i, 0)),   # x (batch-tiled)
        full2d(w1.shape),                                   # (H_pad, 256)
        full2d(b1.shape),                                   # (1, 256) f32
        full2d(w2.shape),                                   # (256, 128)
        full2d(b2.shape),                                   # (1, 128) f32
    ]
    out_specs = pl.BlockSpec((block_b, out_dim), lambda i: (i, 0))
    out_shape = jax.ShapeDtypeStruct((B_pad, out_dim), out_dtype)

    # VMEM budget: double-buffered x/out tiles + (conservatively double-
    # buffered) grid-invariant weights/biases, 1.5x + 4 MiB headroom,
    # clamped to v7x's 64 MiB physical VMEM.
    cbytes = jnp.dtype(compute_dtype).itemsize
    obytes = jnp.dtype(out_dtype).itemsize
    budget = (2 * block_b * H_pad * cbytes
              + 2 * block_b * out_dim * obytes
              + 2 * (H_pad * FUSED_HID * cbytes + FUSED_HID * 4
                     + FUSED_HID * out_dim * cbytes + out_dim * 4))
    vmem_limit = int(min(max(int(budget * 1.5) + (4 << 20), 32 << 20), 64 << 20))

    flops = 2 * B_pad * (H_pad * FUSED_HID + FUSED_HID * out_dim)
    bytes_accessed = (B_pad * H_pad * cbytes            # x read
                      + B_pad * out_dim * obytes        # slab write
                      + H_pad * FUSED_HID * cbytes      # w1
                      + FUSED_HID * out_dim * cbytes    # w2
                      + (FUSED_HID + out_dim) * 4)      # biases

    out = pl.pallas_call(
        _pred_kernel,
        out_shape=out_shape,
        grid_spec=pltpu.PrefetchScalarGridSpec(
            num_scalar_prefetch=0,
            grid=grid,
            in_specs=in_specs,
            out_specs=out_specs,
        ),
        compiler_params=pltpu.CompilerParams(
            dimension_semantics=("parallel",),
            vmem_limit_bytes=vmem_limit,
        ),
        cost_estimate=pl.CostEstimate(
            flops=flops, transcendentals=0, bytes_accessed=bytes_accessed),
    )(xp, w1, b1, w2, b2)

    # Slice the lane-dense slab: policy = cols 0:A, value = col A (squeeze(1)).
    # Keep this inside the same jit as the consumer so it fuses (no extra HBM
    # round-trip of the (B,128) slab).
    return out[:B, :A], out[:B, A]


def init_params(key, hidden_size, actions):
    """Deterministic synthetic init in PyTorch layout (uniform +-1/sqrt(fan_in))."""
    ks = jax.random.split(key, 8)

    def lin(kw, kb, fan_in, fan_out):
        bound = 1.0 / jnp.sqrt(fan_in)
        w = jax.random.uniform(kw, (fan_in, fan_out), jnp.float32, -bound, bound)
        b = jax.random.uniform(kb, (1, fan_out), jnp.float32, -bound, bound)
        return w, b

    w1p, b1p = lin(ks[0], ks[1], hidden_size, HID)
    w2p, b2p = lin(ks[2], ks[3], HID, actions)
    w1v, b1v = lin(ks[4], ks[5], hidden_size, HID)
    w2v, b2v = lin(ks[6], ks[7], HID, 1)
    return dict(w1p=w1p, b1p=b1p, w2p=w2p, b2p=b2p,
                w1v=w1v, b1v=b1v, w2v=w2v, b2v=b2v)


def reference_forward(x, p):
    """Pure-JAX f32 reference of PredModel.forward (unfused)."""
    hp = jnp.maximum(x @ p["w1p"] + p["b1p"], 0.0)
    pol = hp @ p["w2p"] + p["b2p"]
    hv = jnp.maximum(x @ p["w1v"] + p["b1v"], 0.0)
    val = (hv @ p["w2v"] + p["b2v"])[:, 0]
    return pol, val


if __name__ == "__main__":
    batch = 8
    hidden_size = 32
    actions = 6

    key = jax.random.PRNGKey(0)
    kx, kp = jax.random.split(key)
    x = jax.random.normal(kx, (batch, hidden_size), dtype=jnp.float32)
    params = init_params(kp, hidden_size, actions)
    pol_ref, val_ref = reference_forward(x, params)

    # 1) Exact f32 path (fused packing is numerically exact in f32).
    packed_f32 = pack_params(params, actions, compute_dtype=jnp.float32)
    fwd_f32 = jax.jit(lambda xx: pred_model_forward(xx, packed_f32))
    pol, val = jax.block_until_ready(fwd_f32(x))
    assert pol.shape == (batch, actions)
    assert val.shape == (batch,)
    assert jnp.allclose(pol, pol_ref, atol=1e-5, rtol=1e-5)
    assert jnp.allclose(val, val_ref, atol=1e-5, rtol=1e-5)

    # 2) Default deployment path: bf16 MXU operands + bf16 output slab
    #    (f32 accumulation), relaxed tolerance vs. the f32 reference.
    packed_bf16 = pack_params(params, actions)  # compute_dtype=bf16
    fwd_bf16 = jax.jit(lambda xx: pred_model_forward(xx, packed_bf16))
    pol_b, val_b = jax.block_until_ready(fwd_bf16(x))
    assert pol_b.shape == (batch, actions)
    assert val_b.shape == (batch,)
    assert jnp.allclose(pol_b.astype(jnp.float32), pol_ref, atol=5e-2, rtol=5e-2)
    assert jnp.allclose(val_b.astype(jnp.float32), val_ref, atol=5e-2, rtol=5e-2)

    print("KERNEL_OK")
</pallas_src>

<mosaic_0001>
module attributes {stable_mosaic.version = 11 : i64} {
  func.func @_pred_kernel(%arg0: i32, %arg1: memref<8x128xf32, #tpu.memory_space<vmem>>, %arg2: memref<128x256xf32, #tpu.memory_space<vmem>>, %arg3: memref<1x256xf32, #tpu.memory_space<vmem>>, %arg4: memref<256x128xf32, #tpu.memory_space<vmem>>, %arg5: memref<1x128xf32, #tpu.memory_space<vmem>>, %arg6: memref<8x128xf32, #tpu.memory_space<vmem>>) attributes {dimension_semantics = [#tpu.dimension_semantics<parallel>], iteration_bounds = array<i64: 1>, scalar_prefetch = 0 : i64, scratch_operands = 0 : i64, tpu.core_type = #tpu.core_type<tc>, window_params = [{transform_indices = @transform_0, window_bounds = array<i64: 8, 128>}, {pipeline_mode = #tpu.pipeline_mode<synchronous>, transform_indices = @transform_1, window_bounds = array<i64: 128, 256>}, {pipeline_mode = #tpu.pipeline_mode<synchronous>, transform_indices = @transform_2, window_bounds = array<i64: 1, 256>}, {pipeline_mode = #tpu.pipeline_mode<synchronous>, transform_indices = @transform_3, window_bounds = array<i64: 256, 128>}, {pipeline_mode = #tpu.pipeline_mode<synchronous>, transform_indices = @transform_4, window_bounds = array<i64: 1, 128>}, {transform_indices = @transform_5, window_bounds = array<i64: 8, 128>}]} {
    %c0 = arith.constant 0 : index
    %c0_0 = arith.constant 0 : index
    %0 = vector.load %arg1[%c0, %c0_0] : memref<8x128xf32, #tpu.memory_space<vmem>>, vector<8x128xf32>
    %c0_1 = arith.constant 0 : index
    %c0_2 = arith.constant 0 : index
    %1 = vector.load %arg2[%c0_1, %c0_2] : memref<128x256xf32, #tpu.memory_space<vmem>>, vector<128x256xf32>
    %cst = arith.constant dense<0.000000e+00> : vector<8x256xf32>
    %2 = tpu.matmul %0, %1, %cst {dimension_numbers = #tpu.dot_dimension_numbers<[1], [0], [0], [1], [0, 0, 1, 1], [], []>} : vector<8x128xf32>, vector<128x256xf32>, vector<8x256xf32> -> vector<8x256xf32>
    %c0_3 = arith.constant 0 : index
    %c0_4 = arith.constant 0 : index
    %3 = vector.load %arg3[%c0_3, %c0_4] : memref<1x256xf32, #tpu.memory_space<vmem>>, vector<1x256xf32>
    %4 = vector.broadcast %3 : vector<1x256xf32> to vector<8x256xf32>
    %5 = arith.addf %2, %4 : vector<8x256xf32>
    %cst_5 = arith.constant 0.000000e+00 : f32
    %6 = vector.broadcast %cst_5 : f32 to vector<8x256xf32>
    %7 = arith.maximumf %5, %6 : vector<8x256xf32>
    %c0_6 = arith.constant 0 : index
    %c0_7 = arith.constant 0 : index
    %8 = vector.load %arg4[%c0_6, %c0_7] : memref<256x128xf32, #tpu.memory_space<vmem>>, vector<256x128xf32>
    %cst_8 = arith.constant dense<0.000000e+00> : vector<8x128xf32>
    %9 = tpu.matmul %7, %8, %cst_8 {dimension_numbers = #tpu.dot_dimension_numbers<[1], [0], [0], [1], [0, 0, 1, 1], [], []>} : vector<8x256xf32>, vector<256x128xf32>, vector<8x128xf32> -> vector<8x128xf32>
    %c0_9 = arith.constant 0 : index
    %c0_10 = arith.constant 0 : index
    %10 = vector.load %arg5[%c0_9, %c0_10] : memref<1x128xf32, #tpu.memory_space<vmem>>, vector<1x128xf32>
    %11 = vector.broadcast %10 : vector<1x128xf32> to vector<8x128xf32>
    %12 = arith.addf %9, %11 : vector<8x128xf32>
    %c0_11 = arith.constant 0 : index
    %c0_12 = arith.constant 0 : index
    %13 = vector.load %arg6[%c0_11, %c0_12] : memref<8x128xf32, #tpu.memory_space<vmem>>, vector<8x128xf32>
    tpu.vector_store %arg6[%c0_11, %c0_12], %12 {strides = array<i32>} : memref<8x128xf32, #tpu.memory_space<vmem>>, vector<8x128xf32>,
    return
  }
  func.func @transform_0(%arg0: i32) -> (i32, i32) {
    %c0_i32 = arith.constant 0 : i32
    %c0_i32_0 = arith.constant 0 : i32
    return %arg0, %c0_i32 : i32, i32
  }
  func.func @transform_1(%arg0: i32) -> (i32, i32) {
    %c0_i32 = arith.constant 0 : i32
    %c0_i32_0 = arith.constant 0 : i32
    %c0_i32_1 = arith.constant 0 : i32
    return %c0_i32, %c0_i32_0 : i32, i32
  }
  func.func @transform_2(%arg0: i32) -> (i32, i32) {
    %c0_i32 = arith.constant 0 : i32
    %c0_i32_0 = arith.constant 0 : i32
    %c0_i32_1 = arith.constant 0 : i32
    return %c0_i32, %c0_i32_0 : i32, i32
  }
  func.func @transform_3(%arg0: i32) -> (i32, i32) {
    %c0_i32 = arith.constant 0 : i32
    %c0_i32_0 = arith.constant 0 : i32
    %c0_i32_1 = arith.constant 0 : i32
    return %c0_i32, %c0_i32_0 : i32, i32
  }
  func.func @transform_4(%arg0: i32) -> (i32, i32) {
    %c0_i32 = arith.constant 0 : i32
    %c0_i32_0 = arith.constant 0 : i32
    %c0_i32_1 = arith.constant 0 : i32
    return %c0_i32, %c0_i32_0 : i32, i32
  }
  func.func @transform_5(%arg0: i32) -> (i32, i32) {
    %c0_i32 = arith.constant 0 : i32
    %c0_i32_0 = arith.constant 0 : i32
    return %arg0, %c0_i32 : i32, i32
  }
}

</mosaic_0001>

<llo_original>
// kernel: _lambda_.1
$region0: #{_lambda_.1}
  #allocation0 [shape = 'u32[]', space=smem, size = 0x4, offset = 0x4, fixed_abs, tag = 'smem constant byte address 0x4 - core index']
  #allocation1 [shape = 'u32[72,128]{1,0:T(1,128)}', space=vmem, size = 0x9000, scoped, tag = 'internal scratch']
  %s0 = inlined_call_operand.vmem [shape: f32[8,128], index: 0, kind: input, shape index: {}]
  %s1 = inlined_call_operand.hbm [shape: f32[128,256], index: 1, kind: input, shape index: {}]
  %s2 = inlined_call_operand.vmem [shape: f32[1,256], index: 2, kind: input, shape index: {}]
  %s3 = inlined_call_operand.hbm [shape: f32[256,128], index: 3, kind: input, shape index: {}]
  %s4 = inlined_call_operand.vmem [shape: f32[1,128], index: 4, kind: input, shape index: {}]
  %s5 = inlined_call_operand.vmem [shape: f32[8,128], index: 5, kind: output, shape index: {}]
  %s6 = sld [smem:[#allocation0]]
  $region38: #{_lambda_.1} parent=0
    _
  %s8 = ssub.s32 1, %s6
  %s9 = scalar_select 0, %s8, %s6
  $region1: #{_lambda_.1} parent=0
    #allocation2 [shape = 'u8[131072]{0}', space=vmem, size = 0x20000, scoped, tag = 'input window, operand 1, single buffered']
    #allocation3 [shape = 's32[1]{0}', space=sflag, size = 0x4, scoped, tag = 'scoped memory for _lambda_.1']
    #allocation4 [shape = 'u8[131072]{0}', space=vmem, size = 0x20000, scoped, tag = 'input window, operand 3, single buffered']
    #allocation5 [shape = 's32[1]{0}', space=sflag, size = 0x4, scoped, tag = 'scoped memory for _lambda_.1']
    %10 = vsyncpa [#allocation3], 0
    %11 = vsyncpa [#allocation5], 0
    // Predicated region
    $region2: #{_lambda_.1} parent=1 // pred_check
      _
    $region3: #{_lambda_.1} parent=1 // pred_check_branch
      %13 = sbr.rel (0) target = $region5
    $region4: #{_lambda_.1} parent=1 // pred_region
      _
    $region5: #{_lambda_.1} parent=1 // pred_fallthru
      _
    // Predicated region
    $region6: #{_lambda_.1} parent=1 // pred_check
      _
    $region7: #{_lambda_.1} parent=1 // pred_check_branch
      %15 = sbr.rel (0) target = $region9
    $region8: #{_lambda_.1} parent=1 // pred_region
      %17 = vsyncadd [#allocation3], 0
      %s18 = sshll.u32 %s1, 4
      %s19 = int_to_ptr.hbm [resolvable:$true] %s18
      %s20 = sshll.u32 [#allocation2], 4
      %s21 = int_to_ptr.vmem [resolvable:$true] %s20
      %26 = dma.hbm_to_vmem [thread:$0]  %s19, 4096, %s21, [#allocation3], 256, 256, 16
    $region9: #{_lambda_.1} parent=1 // pred_fallthru
      _
    // Predicated region
    $region10: #{_lambda_.1} parent=1 // pred_check
      _
    $region11: #{_lambda_.1} parent=1 // pred_check_branch
      %28 = sbr.rel (0) target = $region13
    $region12: #{_lambda_.1} parent=1 // pred_region
      _
    $region13: #{_lambda_.1} parent=1 // pred_fallthru
      _
    // Predicated region
    $region14: #{_lambda_.1} parent=1 // pred_check
      _
    $region15: #{_lambda_.1} parent=1 // pred_check_branch
      %30 = sbr.rel (0) target = $region17
    $region16: #{_lambda_.1} parent=1 // pred_region
      %32 = vsyncadd [#allocation5], 0
      %s33 = sshll.u32 %s3, 4
      %s34 = int_to_ptr.hbm [resolvable:$true] %s33
      %s35 = sshll.u32 [#allocation4], 4
      %s36 = int_to_ptr.vmem [resolvable:$true] %s35
      %41 = dma.hbm_to_vmem [thread:$0]  %s34, 4096, %s36, [#allocation5], 128, 128, 8
    $region17: #{_lambda_.1} parent=1 // pred_fallthru
      _
    // Predicated region
    $region18: #{_lambda_.1} parent=1 // pred_check
      _
    $region19: #{_lambda_.1} parent=1 // pred_check_branch
      %43 = sbr.rel (0) target = $region21
    $region20: #{_lambda_.1} parent=1 // pred_region
      _
    $region21: #{_lambda_.1} parent=1 // pred_fallthru
      _
    // Predicated region
    $region22: #{_lambda_.1} parent=1 // pred_check
      _
    $region23: #{_lambda_.1} parent=1 // pred_check_branch
      %45 = sbr.rel (0) target = $region25
    $region24: #{_lambda_.1} parent=1 // pred_region
      %47 = dma.done [#allocation3], 4096
    $region25: #{_lambda_.1} parent=1 // pred_fallthru
      _
    // Predicated region
    $region26: #{_lambda_.1} parent=1 // pred_check
      _
    $region27: #{_lambda_.1} parent=1 // pred_check_branch
      %49 = sbr.rel (0) target = $region29
    $region28: #{_lambda_.1} parent=1 // pred_region
      %51 = dma.done [#allocation5], 4096
    $region29: #{_lambda_.1} parent=1 // pred_fallthru
      _
    %v52 = vld [vmem:[%s0] sm:$0xff]
    %v53 = vld [vmem:[#allocation2] sm:$0xff]
    %v54 = vld [vmem:[#allocation2 + $0x8] sm:$0xff]
    %v55 = vld [vmem:[#allocation2 + $0x10] sm:$0xff]
    %v56 = vld [vmem:[#allocation2 + $0x18] sm:$0xff]
    %v57 = vld [vmem:[#allocation2 + $0x20] sm:$0xff]
    %v58 = vld [vmem:[#allocation2 + $0x28] sm:$0xff]
    %v59 = vld [vmem:[#allocation2 + $0x30] sm:$0xff]
    %v60 = vld [vmem:[#allocation2 + $0x38] sm:$0xff]
    %v61 = vld [vmem:[#allocation2 + $0x40] sm:$0xff]
    %v62 = vld [vmem:[#allocation2 + $0x48] sm:$0xff]
    %v63 = vld [vmem:[#allocation2 + $0x50] sm:$0xff]
    %v64 = vld [vmem:[#allocation2 + $0x58] sm:$0xff]
    %v65 = vld [vmem:[#allocation2 + $0x60] sm:$0xff]
    %v66 = vld [vmem:[#allocation2 + $0x68] sm:$0xff]
    %v67 = vld [vmem:[#allocation2 + $0x70] sm:$0xff]
    %v68 = vld [vmem:[#allocation2 + $0x78] sm:$0xff]
    %v69 = vld [vmem:[#allocation2 + $0x80] sm:$0xff]
    %v70 = vld [vmem:[#allocation2 + $0x88] sm:$0xff]
    %v71 = vld [vmem:[#allocation2 + $0x90] sm:$0xff]
    %v72 = vld [vmem:[#allocation2 + $0x98] sm:$0xff]
    %v73 = vld [vmem:[#allocation2 + $0xa0] sm:$0xff]
    %v74 = vld [vmem:[#allocation2 + $0xa8] sm:$0xff]
    %v75 = vld [vmem:[#allocation2 + $0xb0] sm:$0xff]
    %v76 = vld [vmem:[#allocation2 + $0xb8] sm:$0xff]
    %v77 = vld [vmem:[#allocation2 + $0xc0] sm:$0xff]
    %v78 = vld [vmem:[#allocation2 + $0xc8] sm:$0xff]
    %v79 = vld [vmem:[#allocation2 + $0xd0] sm:$0xff]
    %v80 = vld [vmem:[#allocation2 + $0xd8] sm:$0xff]
    %v81 = vld [vmem:[#allocation2 + $0xe0] sm:$0xff]
    %v82 = vld [vmem:[#allocation2 + $0xe8] sm:$0xff]
    %v83 = vld [vmem:[#allocation2 + $0xf0] sm:$0xff]
    %v84 = vld [vmem:[#allocation2 + $0xf8] sm:$0xff]
    %v85 = vld [vmem:[%s2] sm:$0x3]
    %v87 = vperm.slane %v85, 0
    %v88 = vperm.slane %v85, 1
    %91 = vmatpush.msra.mxu0 %v83
    %92 = vmatpush.msra.mxu0 %v81
    %93 = vmatpush.msra.mxu0 %v79
    %94 = vmatpush.msra.mxu0 %v77
    %95 = vmatpush.msra.mxu0 %v75
    %96 = vmatpush.msra.mxu0 %v73
    %97 = vmatpush.msra.mxu0 %v71
    %98 = vmatpush.msra.mxu0 %v69
    %99 = vmatpush.msra.mxu0 %v67
    %100 = vmatpush.msra.mxu0 %v65
    %101 = vmatpush.msra.mxu0 %v63
    %102 = vmatpush.msra.mxu0 %v61
    %103 = vmatpush.msra.mxu0 %v59
    %104 = vmatpush.msra.mxu0 %v57
    %105 = vmatpush.msra.mxu0 %v55
    %106 = vmatpush.msra.mxu0 %v53
    %107 = vmatmul.f32.gmra.mxu0 %v52
    %v108 = vpop.f32.mrf.mxu0
    %v109 = vadd.f32 %v87, %v108
    %110 = vdwg.mxu0
    %111 = vmatpush.msra.mxu0 %v84
    %112 = vmatpush.msra.mxu0 %v82
    %113 = vmatpush.msra.mxu0 %v80
    %114 = vmatpush.msra.mxu0 %v78
    %115 = vmatpush.msra.mxu0 %v76
    %116 = vmatpush.msra.mxu0 %v74
    %117 = vmatpush.msra.mxu0 %v72
    %118 = vmatpush.msra.mxu0 %v70
    %119 = vmatpush.msra.mxu0 %v68
    %120 = vmatpush.msra.mxu0 %v66
    %121 = vmatpush.msra.mxu0 %v64
    %122 = vmatpush.msra.mxu0 %v62
    %123 = vmatpush.msra.mxu0 %v60
    %124 = vmatpush.msra.mxu0 %v58
    %125 = vmatpush.msra.mxu0 %v56
    %126 = vmatpush.msra.mxu0 %v54
    %127 = vmatmul.f32.gmra.mxu0 %v52
    %v128 = vpop.f32.mrf.mxu0
    %v129 = vadd.f32 %v88, %v128
    %130 = vdwg.mxu0
    %v131 = vmax.f32 %v109, 0.0
    %v132 = vmax.f32 %v129, 0.0
    %v133 = vld [vmem:[#allocation4] sm:$0xff]
    %v134 = vld [vmem:[#allocation4 + $0x8] sm:$0xff]
    %v135 = vld [vmem:[#allocation4 + $0x10] sm:$0xff]
    %v136 = vld [vmem:[#allocation4 + $0x18] sm:$0xff]
    %v137 = vld [vmem:[#allocation4 + $0x20] sm:$0xff]
    %v138 = vld [vmem:[#allocation4 + $0x28] sm:$0xff]
    %v139 = vld [vmem:[#allocation4 + $0x30] sm:$0xff]
    %v140 = vld [vmem:[#allocation4 + $0x38] sm:$0xff]
    %v141 = vld [vmem:[#allocation4 + $0x40] sm:$0xff]
    %v142 = vld [vmem:[#allocation4 + $0x48] sm:$0xff]
    %v143 = vld [vmem:[#allocation4 + $0x50] sm:$0xff]
    %v144 = vld [vmem:[#allocation4 + $0x58] sm:$0xff]
    %v145 = vld [vmem:[#allocation4 + $0x60] sm:$0xff]
    %v146 = vld [vmem:[#allocation4 + $0x68] sm:$0xff]
    %v147 = vld [vmem:[#allocation4 + $0x70] sm:$0xff]
    %v148 = vld [vmem:[#allocation4 + $0x78] sm:$0xff]
    %v149 = vld [vmem:[#allocation4 + $0x80] sm:$0xff]
    %v150 = vld [vmem:[#allocation4 + $0x88] sm:$0xff]
    %v151 = vld [vmem:[#allocation4 + $0x90] sm:$0xff]
    %v152 = vld [vmem:[#allocation4 + $0x98] sm:$0xff]
    %v153 = vld [vmem:[#allocation4 + $0xa0] sm:$0xff]
    %v154 = vld [vmem:[#allocation4 + $0xa8] sm:$0xff]
    %v155 = vld [vmem:[#allocation4 + $0xb0] sm:$0xff]
    %v156 = vld [vmem:[#allocation4 + $0xb8] sm:$0xff]
    %v157 = vld [vmem:[#allocation4 + $0xc0] sm:$0xff]
    %v158 = vld [vmem:[#allocation4 + $0xc8] sm:$0xff]
    %v159 = vld [vmem:[#allocation4 + $0xd0] sm:$0xff]
    %v160 = vld [vmem:[#allocation4 + $0xd8] sm:$0xff]
    %v161 = vld [vmem:[#allocation4 + $0xe0] sm:$0xff]
    %v162 = vld [vmem:[#allocation4 + $0xe8] sm:$0xff]
    %v163 = vld [vmem:[#allocation4 + $0xf0] sm:$0xff]
    %v164 = vld [vmem:[#allocation4 + $0xf8] sm:$0xff]
    %v165 = vld [vmem:[%s4] sm:$0x1]
    %v167 = vperm.slane %v165, 0
    %169 = vmatpush.msra.mxu0 %v148
    %170 = vmatpush.msra.mxu0 %v147
    %171 = vmatpush.msra.mxu0 %v146
    %172 = vmatpush.msra.mxu0 %v145
    %173 = vmatpush.msra.mxu0 %v144
    %174 = vmatpush.msra.mxu0 %v143
    %175 = vmatpush.msra.mxu0 %v142
    %176 = vmatpush.msra.mxu0 %v141
    %177 = vmatpush.msra.mxu0 %v140
    %178 = vmatpush.msra.mxu0 %v139
    %179 = vmatpush.msra.mxu0 %v138
    %180 = vmatpush.msra.mxu0 %v137
    %181 = vmatpush.msra.mxu0 %v136
    %182 = vmatpush.msra.mxu0 %v135
    %183 = vmatpush.msra.mxu0 %v134
    %184 = vmatpush.msra.mxu0 %v133
    %185 = vmatmul.f32.gmra.mxu0 %v131
    %v186 = vpop.f32.mrf.mxu0
    %v187 = vadd.f32 %v167, %v186
    %188 = vdwg.mxu0
    %189 = vmatpush.msra.mxu0 %v164
    %190 = vmatpush.msra.mxu0 %v163
    %191 = vmatpush.msra.mxu0 %v162
    %192 = vmatpush.msra.mxu0 %v161
    %193 = vmatpush.msra.mxu0 %v160
    %194 = vmatpush.msra.mxu0 %v159
    %195 = vmatpush.msra.mxu0 %v158
    %196 = vmatpush.msra.mxu0 %v157
    %197 = vmatpush.msra.mxu0 %v156
    %198 = vmatpush.msra.mxu0 %v155
    %199 = vmatpush.msra.mxu0 %v154
    %200 = vmatpush.msra.mxu0 %v153
    %201 = vmatpush.msra.mxu0 %v152
    %202 = vmatpush.msra.mxu0 %v151
    %203 = vmatpush.msra.mxu0 %v150
    %204 = vmatpush.msra.mxu0 %v149
    %205 = vmatmul.f32.gmra.mxu0 %v132
    %v206 = vpop.f32.mrf.mxu0
    %v207 = vadd.f32 %v187, %v206
    %208 = vdwg.mxu0
    %209 = vst [vmem:[%s5] sm:$0xff] %v207
    // Predicated region
    $region30: #{_lambda_.1} parent=1 // pred_check
      _
    $region31: #{_lambda_.1} parent=1 // pred_check_branch
      %211 = sbr.rel (0) target = $region33
    $region32: #{_lambda_.1} parent=1 // pred_region
      _
    $region33: #{_lambda_.1} parent=1 // pred_fallthru
      _
    // Predicated region
    $region34: #{_lambda_.1} parent=1 // pred_check
      _
    $region35: #{_lambda_.1} parent=1 // pred_check_branch
      %213 = sbr.rel (0) target = $region37
    $region36: #{_lambda_.1} parent=1 // pred_region
      _
    $region37: #{_lambda_.1} parent=1 // pred_fallthru
      _
    %214 = vsyncpa [#allocation3], 1
    %215 = vsyncpa [#allocation5], 1

</llo_original>
